<compile_context>
chip_gen: v7x
topology: tpu7x:2x2x1
jax: 0.10.0
libtpu: 0.0.40
codegen_flags: <defaults>
</compile_context>

<pallas_src>
import functools

import jax
import jax.numpy as jnp
import numpy as np
from jax import lax
from jax.experimental import pallas as pl
from jax.experimental.pallas import tpu as pltpu

NEG_POS_RATIO = 3  # hard_negative_mining(..., neg_pos_ratio=3.0)


def _pick_tile(n, cap):
    """Largest multiple of 128 that divides n and is <= cap (n assumed %128==0)."""
    t = (min(cap, n) // 128) * 128
    while t >= 128:
        if n % t == 0:
            return t
        t -= 128
    return n


# --------------------------------------------------------------------------
# Kernel 1: per-anchor statistics (log-softmax computed exactly once).
# --------------------------------------------------------------------------
def _per_anchor_kernel(confs_ref, bbox_ref, gtb_ref, labels_ref, anch_ref,
                       mined_ref, ce_ref, reg_ref, *, scale_xy, scale_wh):
    x = confs_ref[...]                 # [C, TA]  class logits (classes on sublanes)
    labels = labels_ref[...]           # [1, TA]  int32

    # log-sum-exp over the class dim (sublane reduce), no full logp temporary.
    m = jnp.max(x, axis=0, keepdims=True)
    lse = m + jnp.log(jnp.sum(jnp.exp(x - m), axis=0, keepdims=True))   # [1, TA]

    bg_nll = lse - x[0:1, :]           # -log p(background)
    pos = labels > 0                   # [1, TA]
    mined_ref[...] = jnp.where(pos, -jnp.inf, bg_nll)

    # per-anchor cross entropy:  lse - logit[true class]
    cls_iota = lax.broadcasted_iota(jnp.int32, x.shape, 0)
    true_logit = jnp.sum(jnp.where(cls_iota == labels, x, 0.0),
                         axis=0, keepdims=True)                          # [1, TA]
    ce_ref[...] = lse - true_logit

    # localization: SSD loc-vec encoding + smooth-L1, masked to positives.
    bbox = bbox_ref[...]               # [4, TA]
    gtb = gtb_ref[...]                 # [4, TA]
    anch = anch_ref[...]               # [4, TA]
    a_xy = anch[0:2, :]
    a_wh = anch[2:4, :]
    gxy = scale_xy * (gtb[0:2, :] - a_xy) / a_wh
    gwh = scale_wh * jnp.log(gtb[2:4, :] / a_wh)

    def sl1(d):
        ad = jnp.abs(d)
        return jnp.where(ad < 1.0, 0.5 * d * d, ad - 0.5)

    reg = (jnp.sum(sl1(bbox[0:2, :] - gxy), axis=0, keepdims=True) +
           jnp.sum(sl1(bbox[2:4, :] - gwh), axis=0, keepdims=True))      # [1, TA]
    reg_ref[...] = jnp.where(pos, reg, 0.0)


# --------------------------------------------------------------------------
# Kernel 2: tiled hard-negative mining (rank on MXU) + masked cls-loss sum.
# --------------------------------------------------------------------------
def _mining_cls_kernel(minedr_ref, minedc_ref, ce_ref, labels_ref, nneg_ref,
                       out_ref, rank_ref, *, ti, tj):
    i = pl.program_id(1)
    j = pl.program_id(2)
    nj = pl.num_programs(2)

    @pl.when(j == 0)
    def _():
        rank_ref[...] = jnp.zeros_like(rank_ref)

    li = minedr_ref[...]               # [1, TI]  L_i on lanes
    lj = minedc_ref[...]               # [TJ, 1]  L_j on sublanes

    # rank_i = #{j : L_j > L_i} + #{j < i : L_j == L_i}  (stable descending rank)
    # (self is excluded automatically: equal-but-not-before on the diagonal.)
    jvec = lax.broadcasted_iota(jnp.int32, (tj, 1), 0) + j * tj
    ivec = lax.broadcasted_iota(jnp.int32, (1, ti), 1) + i * ti
    before = (lj > li) | ((lj == li) & (jvec < ivec))                    # [TJ, TI]

    # Sublane reduction on the MXU: ones[8,TJ] @ before -> [8,TI], take row 0.
    before_bf = jnp.where(before, jnp.bfloat16(1.0), jnp.bfloat16(0.0))
    ones8 = jnp.ones((8, tj), jnp.bfloat16)
    partial = jnp.dot(ones8, before_bf,
                      preferred_element_type=jnp.float32)[0:1, :]        # [1, TI]
    rank_ref[...] += partial

    @pl.when(j == nj - 1)
    def _():
        neg = rank_ref[...] < nneg_ref[...]          # [1, TI]
        posm = labels_ref[...] > 0                   # [1, TI]
        mask = posm | neg
        csum = jnp.sum(jnp.where(mask, ce_ref[...], 0.0),
                       axis=1, keepdims=True)        # [1, 1]
        lane = lax.broadcasted_iota(jnp.int32, (1, 128), 1)
        out_ref[...] = jnp.where(lane == 0, csum, 0.0)


# --------------------------------------------------------------------------
# Wrapper: mirrors SSDMultiboxLoss.forward.
# --------------------------------------------------------------------------
def ssd_multibox_loss(bbox_delta, confs, gt_bbox, gt_labels, anchors,
                      scale_xy=10.0, scale_wh=5.0, *, ta=None, ti=None, tj=None):
    """bbox_delta: [B,4,NA]  confs: [B,C,NA]  gt_bbox: [B,NA,4]
    gt_labels: [B,NA] int   anchors: [1,4,NA] (xywh)
    Returns (total_loss, dict(regression_loss, classification_loss, total_loss))."""
    confs = confs.astype(jnp.float32)
    bbox_delta = bbox_delta.astype(jnp.float32)
    anchors = anchors.astype(jnp.float32)
    gtb = jnp.transpose(gt_bbox, (0, 2, 1)).astype(jnp.float32)          # [B,4,NA]
    labels = gt_labels.astype(jnp.int32)

    B, C, NA = confs.shape
    assert NA % 128 == 0, "anchors must be padded to a multiple of 128"

    ta = ta or _pick_tile(NA, 2048)    # kernel-1 anchor tile
    ti = ti or _pick_tile(NA, 1024)    # mining i-tile (lanes)
    tj = tj or _pick_tile(NA, 512)     # mining j-chunk (sublanes)

    labels_row = labels[:, None, :]                                      # [B,1,NA]

    # ---- kernel 1: per-anchor rows -------------------------------------
    k1 = functools.partial(_per_anchor_kernel,
                           scale_xy=float(scale_xy), scale_wh=float(scale_wh))
    row_shape = jax.ShapeDtypeStruct((B, 1, NA), jnp.float32)
    mined, ce, regpos = pl.pallas_call(
        k1,
        grid=(B, NA // ta),
        in_specs=[
            pl.BlockSpec((None, C, ta), lambda b, a: (b, 0, a)),   # confs
            pl.BlockSpec((None, 4, ta), lambda b, a: (b, 0, a)),   # bbox_delta
            pl.BlockSpec((None, 4, ta), lambda b, a: (b, 0, a)),   # gt boxes
            pl.BlockSpec((None, 1, ta), lambda b, a: (b, 0, a)),   # labels
            pl.BlockSpec((None, 4, ta), lambda b, a: (0, 0, a)),   # anchors
        ],
        out_specs=(pl.BlockSpec((None, 1, ta), lambda b, a: (b, 0, a)),) * 3,
        out_shape=(row_shape,) * 3,
        compiler_params=pltpu.CompilerParams(
            dimension_semantics=("parallel", "parallel")),
    )(confs, bbox_delta, gtb, labels_row, anchors)

    # per-image positive counts / negative budget (tiny, plain JAX)
    num_pos_img = jnp.sum((labels > 0).astype(jnp.float32), axis=1)      # [B]
    num_neg = (NEG_POS_RATIO * num_pos_img).reshape(B, 1, 1)             # [B,1,1]

    # anchor-major (column) view of the mined loss — free reshape, the layout
    # change happens in the DMA that loads kernel 2's [TJ,1] blocks.
    mined_col = mined.reshape(B, NA, 1)

    # ---- kernel 2: hard-negative mining + masked classification sum ----
    ni, nj = NA // ti, NA // tj
    k2 = functools.partial(_mining_cls_kernel, ti=ti, tj=tj)
    cls_part = pl.pallas_call(
        k2,
        grid=(B, ni, nj),
        in_specs=[
            pl.BlockSpec((None, 1, ti), lambda b, i, j: (b, 0, i)),   # mined row (L_i)
            pl.BlockSpec((None, tj, 1), lambda b, i, j: (b, j, 0)),   # mined col (L_j)
            pl.BlockSpec((None, 1, ti), lambda b, i, j: (b, 0, i)),   # cross entropy
            pl.BlockSpec((None, 1, ti), lambda b, i, j: (b, 0, i)),   # labels
            pl.BlockSpec((None, 1, 1), lambda b, i, j: (b, 0, 0)),    # num_neg
        ],
        out_specs=pl.BlockSpec((None, 1, 128), lambda b, i, j: (b, 0, i)),
        out_shape=jax.ShapeDtypeStruct((B, 1, ni * 128), jnp.float32),
        scratch_shapes=[pltpu.VMEM((1, ti), jnp.float32)],               # rank acc
        compiler_params=pltpu.CompilerParams(
            dimension_semantics=("parallel", "arbitrary", "arbitrary"),
            vmem_limit_bytes=32 * 1024 * 1024),
    )(mined, mined_col, ce, labels_row, num_neg)

    # ---- batch-level totals / normalization (tiny, plain JAX) ----------
    num_pos = jnp.sum(num_pos_img)
    reg_sum = jnp.sum(regpos)
    cls_sum = jnp.sum(cls_part)
    reg_n = reg_sum / num_pos
    cls_n = cls_sum / num_pos
    total = reg_n + cls_n
    to_log = dict(regression_loss=reg_n, classification_loss=cls_n,
                  total_loss=total)
    return total, to_log


# --------------------------------------------------------------------------
# Pure-JAX mirror of the PyTorch forward (verification only).
# --------------------------------------------------------------------------
def _reference_loss(bbox_delta, confs, gt_bbox, gt_labels, anchors,
                    scale_xy, scale_wh):
    gtb = jnp.transpose(gt_bbox, (0, 2, 1))
    logp = jax.nn.log_softmax(confs, axis=1)
    to_log = -logp[:, 0, :]
    pos_mask = gt_labels > 0
    num_pos = jnp.sum(pos_mask.astype(jnp.int32), axis=1, keepdims=True)
    num_neg = num_pos * NEG_POS_RATIO
    loss = jnp.where(pos_mask, -jnp.inf, to_log)
    indexes = jnp.argsort(-loss, axis=1)       # descending sort
    orders = jnp.argsort(indexes, axis=1)
    neg_mask = orders < num_neg
    mask = pos_mask | neg_mask
    C = confs.shape[1]
    onehot = jax.nn.one_hot(gt_labels, C, axis=1, dtype=confs.dtype)
    ce = -jnp.sum(onehot * logp, axis=1)
    cls = jnp.sum(jnp.where(mask, ce, 0.0))
    a_xy, a_wh = anchors[:, :2, :], anchors[:, 2:, :]
    gxy = scale_xy * (gtb[:, :2, :] - a_xy) / a_wh
    gwh = scale_wh * jnp.log(gtb[:, 2:, :] / a_wh)
    gt_loc = jnp.concatenate([gxy, gwh], axis=1)
    d = bbox_delta - gt_loc
    ad = jnp.abs(d)
    sl1 = jnp.where(ad < 1.0, 0.5 * d * d, ad - 0.5)
    reg = jnp.sum(jnp.where(pos_mask[:, None, :], sl1, 0.0))
    npos = jnp.sum(pos_mask.astype(jnp.float32))
    return reg / npos + cls / npos, reg / npos, cls / npos


if __name__ == "__main__":
    B, C, NA = 2, 8, 512
    key = jax.random.PRNGKey(0)
    ks = jax.random.split(key, 8)

    confs = jax.random.normal(ks[0], (B, C, NA), jnp.float32)
    bbox_delta = jax.random.normal(ks[1], (B, 4, NA), jnp.float32)

    # anchors: the module's frozen Parameter [1, 4, NA] (xywh)
    a_xy = jax.random.uniform(ks[2], (1, 2, NA), minval=0.05, maxval=0.95)
    a_wh = jax.random.uniform(ks[3], (1, 2, NA), minval=0.10, maxval=0.50)
    anchors = jnp.concatenate([a_xy, a_wh], axis=1).astype(jnp.float32)

    # ground-truth boxes [B, NA, 4] (xywh) and labels [B, NA]
    g_xy = jax.random.uniform(ks[4], (B, NA, 2), minval=0.0, maxval=1.0)
    g_wh = jax.random.uniform(ks[5], (B, NA, 2), minval=0.05, maxval=0.60)
    gt_bbox = jnp.concatenate([g_xy, g_wh], axis=2).astype(jnp.float32)
    is_pos = jax.random.uniform(ks[6], (B, NA)) < 0.2
    cls_id = jax.random.randint(ks[7], (B, NA), 1, C)
    gt_labels = jnp.where(is_pos, cls_id, 0).astype(jnp.int32)

    scale_xy, scale_wh = 10.0, 5.0   # 1/0.1, 1/0.2

    # small tiles so the toy test exercises the full grid / accumulation paths
    total, logs = ssd_multibox_loss(bbox_delta, confs, gt_bbox, gt_labels,
                                    anchors, scale_xy, scale_wh,
                                    ta=256, ti=256, tj=128)
    total = jax.block_until_ready(total)

    ref_total, ref_reg, ref_cls = _reference_loss(
        bbox_delta, confs, gt_bbox, gt_labels, anchors, scale_xy, scale_wh)
    np.testing.assert_allclose(np.asarray(total), np.asarray(ref_total),
                               rtol=1e-4, atol=1e-4)
    np.testing.assert_allclose(np.asarray(logs["regression_loss"]),
                               np.asarray(ref_reg), rtol=1e-4, atol=1e-4)
    np.testing.assert_allclose(np.asarray(logs["classification_loss"]),
                               np.asarray(ref_cls), rtol=1e-4, atol=1e-4)
    print("KERNEL_OK")
</pallas_src>

<mosaic_0001>
module attributes {stable_mosaic.version = 11 : i64} {
  func.func @_per_anchor_kernel(%arg0: i32, %arg1: i32, %arg2: memref<1x8x256xf32, #tpu.memory_space<vmem>>, %arg3: memref<1x4x256xf32, #tpu.memory_space<vmem>>, %arg4: memref<1x4x256xf32, #tpu.memory_space<vmem>>, %arg5: memref<1x1x256xi32, #tpu.memory_space<vmem>>, %arg6: memref<1x4x256xf32, #tpu.memory_space<vmem>>, %arg7: memref<1x1x256xf32, #tpu.memory_space<vmem>>, %arg8: memref<1x1x256xf32, #tpu.memory_space<vmem>>, %arg9: memref<1x1x256xf32, #tpu.memory_space<vmem>>) attributes {dimension_semantics = [#tpu.dimension_semantics<parallel>, #tpu.dimension_semantics<parallel>], iteration_bounds = array<i64: 2, 2>, scalar_prefetch = 0 : i64, scratch_operands = 0 : i64, tpu.core_type = #tpu.core_type<tc>, window_params = [{transform_indices = @transform_0, window_bounds = array<i64: 1, 8, 256>}, {transform_indices = @transform_1, window_bounds = array<i64: 1, 4, 256>}, {transform_indices = @transform_2, window_bounds = array<i64: 1, 4, 256>}, {transform_indices = @transform_3, window_bounds = array<i64: 1, 1, 256>}, {transform_indices = @transform_4, window_bounds = array<i64: 1, 4, 256>}, {transform_indices = @transform_5, window_bounds = array<i64: 1, 1, 256>}, {transform_indices = @transform_6, window_bounds = array<i64: 1, 1, 256>}, {transform_indices = @transform_7, window_bounds = array<i64: 1, 1, 256>}]} {
    %c0 = arith.constant 0 : index
    %c0_0 = arith.constant 0 : index
    %c0_1 = arith.constant 0 : index
    %0 = vector.load %arg2[%c0, %c0_0, %c0_1] : memref<1x8x256xf32, #tpu.memory_space<vmem>>, vector<1x8x256xf32>
    %1 = vector.shape_cast %0 : vector<1x8x256xf32> to vector<8x256xf32>
    %c0_2 = arith.constant 0 : index
    %c0_3 = arith.constant 0 : index
    %c0_4 = arith.constant 0 : index
    %2 = vector.load %arg5[%c0_2, %c0_3, %c0_4] : memref<1x1x256xi32, #tpu.memory_space<vmem>>, vector<1x1x256xi32>
    %3 = vector.shape_cast %2 : vector<1x1x256xi32> to vector<1x256xi32>
    %cst = arith.constant dense<0xFF800000> : vector<256xf32>
    %4 = vector.multi_reduction <maximumf>, %1, %cst [0] : vector<8x256xf32> to vector<256xf32>
    %5 = vector.shape_cast %4 : vector<256xf32> to vector<1x256xf32>
    %6 = vector.broadcast %5 : vector<1x256xf32> to vector<8x256xf32>
    %7 = arith.subf %1, %6 : vector<8x256xf32>
    %8 = math.exp %7 : vector<8x256xf32>
    %cst_5 = arith.constant dense<0.000000e+00> : vector<256xf32>
    %9 = vector.multi_reduction <add>, %8, %cst_5 [0] : vector<8x256xf32> to vector<256xf32>
    %10 = vector.shape_cast %9 : vector<256xf32> to vector<1x256xf32>
    %11 = math.log %10 : vector<1x256xf32>
    %12 = arith.addf %5, %11 : vector<1x256xf32>
    %13 = vector.extract_strided_slice %1 {offsets = [0, 0], sizes = [1, 256], strides = [1, 1]} : vector<8x256xf32> to vector<1x256xf32>
    %14 = arith.subf %12, %13 : vector<1x256xf32>
    %c0_i32 = arith.constant 0 : i32
    %15 = vector.broadcast %c0_i32 : i32 to vector<1x256xi32>
    %16 = arith.cmpi sgt, %3, %15 : vector<1x256xi32>
    %cst_6 = arith.constant 0xFF800000 : f32
    %17 = vector.broadcast %cst_6 : f32 to vector<1x256xf32>
    %18 = arith.select %16, %17, %14 : vector<1x256xi1>, vector<1x256xf32>
    %c0_7 = arith.constant 0 : index
    %c0_8 = arith.constant 0 : index
    %c0_9 = arith.constant 0 : index
    %19 = vector.load %arg7[%c0_7, %c0_8, %c0_9] : memref<1x1x256xf32, #tpu.memory_space<vmem>>, vector<1x1x256xf32>
    %20 = vector.shape_cast %19 : vector<1x1x256xf32> to vector<1x256xf32>
    %21 = vector.shape_cast %18 : vector<1x256xf32> to vector<1x1x256xf32>
    tpu.vector_store %arg7[%c0_7, %c0_8, %c0_9], %21 {strides = array<i32>} : memref<1x1x256xf32, #tpu.memory_space<vmem>>, vector<1x1x256xf32>,
    %22 = tpu.iota {dimensions = array<i32: 0>} : vector<8x256xi32>
    %23 = vector.broadcast %3 : vector<1x256xi32> to vector<8x256xi32>
    %24 = arith.cmpi eq, %22, %23 : vector<8x256xi32>
    %cst_10 = arith.constant 0.000000e+00 : f32
    %25 = vector.broadcast %cst_10 : f32 to vector<8x256xf32>
    %26 = arith.select %24, %1, %25 : vector<8x256xi1>, vector<8x256xf32>
    %cst_11 = arith.constant dense<0.000000e+00> : vector<256xf32>
    %27 = vector.multi_reduction <add>, %26, %cst_11 [0] : vector<8x256xf32> to vector<256xf32>
    %28 = vector.shape_cast %27 : vector<256xf32> to vector<1x256xf32>
    %29 = arith.subf %12, %28 : vector<1x256xf32>
    %c0_12 = arith.constant 0 : index
    %c0_13 = arith.constant 0 : index
    %c0_14 = arith.constant 0 : index
    %30 = vector.load %arg8[%c0_12, %c0_13, %c0_14] : memref<1x1x256xf32, #tpu.memory_space<vmem>>, vector<1x1x256xf32>
    %31 = vector.shape_cast %30 : vector<1x1x256xf32> to vector<1x256xf32>
    %32 = vector.shape_cast %29 : vector<1x256xf32> to vector<1x1x256xf32>
    tpu.vector_store %arg8[%c0_12, %c0_13, %c0_14], %32 {strides = array<i32>} : memref<1x1x256xf32, #tpu.memory_space<vmem>>, vector<1x1x256xf32>,
    %c0_15 = arith.constant 0 : index
    %c0_16 = arith.constant 0 : index
    %c0_17 = arith.constant 0 : index
    %33 = vector.load %arg3[%c0_15, %c0_16, %c0_17] : memref<1x4x256xf32, #tpu.memory_space<vmem>>, vector<1x4x256xf32>
    %34 = vector.shape_cast %33 : vector<1x4x256xf32> to vector<4x256xf32>
    %c0_18 = arith.constant 0 : index
    %c0_19 = arith.constant 0 : index
    %c0_20 = arith.constant 0 : index
    %35 = vector.load %arg4[%c0_18, %c0_19, %c0_20] : memref<1x4x256xf32, #tpu.memory_space<vmem>>, vector<1x4x256xf32>
    %36 = vector.shape_cast %35 : vector<1x4x256xf32> to vector<4x256xf32>
    %c0_21 = arith.constant 0 : index
    %c0_22 = arith.constant 0 : index
    %c0_23 = arith.constant 0 : index
    %37 = vector.load %arg6[%c0_21, %c0_22, %c0_23] : memref<1x4x256xf32, #tpu.memory_space<vmem>>, vector<1x4x256xf32>
    %38 = vector.shape_cast %37 : vector<1x4x256xf32> to vector<4x256xf32>
    %39 = vector.extract_strided_slice %38 {offsets = [0, 0], sizes = [2, 256], strides = [1, 1]} : vector<4x256xf32> to vector<2x256xf32>
    %40 = vector.extract_strided_slice %38 {offsets = [2, 0], sizes = [2, 256], strides = [1, 1]} : vector<4x256xf32> to vector<2x256xf32>
    %41 = vector.extract_strided_slice %36 {offsets = [0, 0], sizes = [2, 256], strides = [1, 1]} : vector<4x256xf32> to vector<2x256xf32>
    %42 = arith.subf %41, %39 : vector<2x256xf32>
    %cst_24 = arith.constant 1.000000e+01 : f32
    %43 = vector.broadcast %cst_24 : f32 to vector<2x256xf32>
    %44 = arith.mulf %43, %42 : vector<2x256xf32>
    %45 = arith.divf %44, %40 : vector<2x256xf32>
    %46 = vector.extract_strided_slice %36 {offsets = [2, 0], sizes = [2, 256], strides = [1, 1]} : vector<4x256xf32> to vector<2x256xf32>
    %47 = arith.divf %46, %40 : vector<2x256xf32>
    %48 = math.log %47 : vector<2x256xf32>
    %cst_25 = arith.constant 5.000000e+00 : f32
    %49 = vector.broadcast %cst_25 : f32 to vector<2x256xf32>
    %50 = arith.mulf %49, %48 : vector<2x256xf32>
    %51 = vector.extract_strided_slice %34 {offsets = [0, 0], sizes = [2, 256], strides = [1, 1]} : vector<4x256xf32> to vector<2x256xf32>
    %52 = arith.subf %51, %45 : vector<2x256xf32>
    %53 = math.absf %52 : vector<2x256xf32>
    %cst_26 = arith.constant 1.000000e+00 : f32
    %54 = vector.broadcast %cst_26 : f32 to vector<2x256xf32>
    %55 = arith.cmpf olt, %53, %54 : vector<2x256xf32>
    %cst_27 = arith.constant 5.000000e-01 : f32
    %56 = vector.broadcast %cst_27 : f32 to vector<2x256xf32>
    %57 = arith.mulf %56, %52 : vector<2x256xf32>
    %58 = arith.mulf %57, %52 : vector<2x256xf32>
    %cst_28 = arith.constant 5.000000e-01 : f32
    %59 = vector.broadcast %cst_28 : f32 to vector<2x256xf32>
    %60 = arith.subf %53, %59 : vector<2x256xf32>
    %61 = arith.select %55, %58, %60 : vector<2x256xi1>, vector<2x256xf32>
    %cst_29 = arith.constant dense<0.000000e+00> : vector<256xf32>
    %62 = vector.multi_reduction <add>, %61, %cst_29 [0] : vector<2x256xf32> to vector<256xf32>
    %63 = vector.shape_cast %62 : vector<256xf32> to vector<1x256xf32>
    %64 = vector.extract_strided_slice %34 {offsets = [2, 0], sizes = [2, 256], strides = [1, 1]} : vector<4x256xf32> to vector<2x256xf32>
    %65 = arith.subf %64, %50 : vector<2x256xf32>
    %66 = math.absf %65 : vector<2x256xf32>
    %cst_30 = arith.constant 1.000000e+00 : f32
    %67 = vector.broadcast %cst_30 : f32 to vector<2x256xf32>
    %68 = arith.cmpf olt, %66, %67 : vector<2x256xf32>
    %cst_31 = arith.constant 5.000000e-01 : f32
    %69 = vector.broadcast %cst_31 : f32 to vector<2x256xf32>
    %70 = arith.mulf %69, %65 : vector<2x256xf32>
    %71 = arith.mulf %70, %65 : vector<2x256xf32>
    %cst_32 = arith.constant 5.000000e-01 : f32
    %72 = vector.broadcast %cst_32 : f32 to vector<2x256xf32>
    %73 = arith.subf %66, %72 : vector<2x256xf32>
    %74 = arith.select %68, %71, %73 : vector<2x256xi1>, vector<2x256xf32>
    %cst_33 = arith.constant dense<0.000000e+00> : vector<256xf32>
    %75 = vector.multi_reduction <add>, %74, %cst_33 [0] : vector<2x256xf32> to vector<256xf32>
    %76 = vector.shape_cast %75 : vector<256xf32> to vector<1x256xf32>
    %77 = arith.addf %63, %76 : vector<1x256xf32>
    %cst_34 = arith.constant 0.000000e+00 : f32
    %78 = vector.broadcast %cst_34 : f32 to vector<1x256xf32>
    %79 = arith.select %16, %77, %78 : vector<1x256xi1>, vector<1x256xf32>
    %c0_35 = arith.constant 0 : index
    %c0_36 = arith.constant 0 : index
    %c0_37 = arith.constant 0 : index
    %80 = vector.load %arg9[%c0_35, %c0_36, %c0_37] : memref<1x1x256xf32, #tpu.memory_space<vmem>>, vector<1x1x256xf32>
    %81 = vector.shape_cast %80 : vector<1x1x256xf32> to vector<1x256xf32>
    %82 = vector.shape_cast %79 : vector<1x256xf32> to vector<1x1x256xf32>
    tpu.vector_store %arg9[%c0_35, %c0_36, %c0_37], %82 {strides = array<i32>} : memref<1x1x256xf32, #tpu.memory_space<vmem>>, vector<1x1x256xf32>,
    return
  }
  func.func @transform_0(%arg0: i32, %arg1: i32) -> (i32, i32, i32) {
    %c0_i32 = arith.constant 0 : i32
    %c0_i32_0 = arith.constant 0 : i32
    return %arg0, %c0_i32, %arg1 : i32, i32, i32
  }
  func.func @transform_1(%arg0: i32, %arg1: i32) -> (i32, i32, i32) {
    %c0_i32 = arith.constant 0 : i32
    %c0_i32_0 = arith.constant 0 : i32
    return %arg0, %c0_i32, %arg1 : i32, i32, i32
  }
  func.func @transform_2(%arg0: i32, %arg1: i32) -> (i32, i32, i32) {
    %c0_i32 = arith.constant 0 : i32
    %c0_i32_0 = arith.constant 0 : i32
    return %arg0, %c0_i32, %arg1 : i32, i32, i32
  }
  func.func @transform_3(%arg0: i32, %arg1: i32) -> (i32, i32, i32) {
    %c0_i32 = arith.constant 0 : i32
    %c0_i32_0 = arith.constant 0 : i32
    return %arg0, %c0_i32, %arg1 : i32, i32, i32
  }
  func.func @transform_4(%arg0: i32, %arg1: i32) -> (i32, i32, i32) {
    %c0_i32 = arith.constant 0 : i32
    %c0_i32_0 = arith.constant 0 : i32
    %c0_i32_1 = arith.constant 0 : i32
    return %c0_i32, %c0_i32_0, %arg1 : i32, i32, i32
  }
  func.func @transform_5(%arg0: i32, %arg1: i32) -> (i32, i32, i32) {
    %c0_i32 = arith.constant 0 : i32
    %c0_i32_0 = arith.constant 0 : i32
    return %arg0, %c0_i32, %arg1 : i32, i32, i32
  }
  func.func @transform_6(%arg0: i32, %arg1: i32) -> (i32, i32, i32) {
    %c0_i32 = arith.constant 0 : i32
    %c0_i32_0 = arith.constant 0 : i32
    return %arg0, %c0_i32, %arg1 : i32, i32, i32
  }
  func.func @transform_7(%arg0: i32, %arg1: i32) -> (i32, i32, i32) {
    %c0_i32 = arith.constant 0 : i32
    %c0_i32_0 = arith.constant 0 : i32
    return %arg0, %c0_i32, %arg1 : i32, i32, i32
  }
}

</mosaic_0001>

<llo_original>
// kernel: tpu_custom_call.1
$region0: #{tpu_custom_call.1}
  #allocation0 [shape = 'u32[]', space=smem, size = 0x4, offset = 0x4, fixed_abs, tag = 'smem constant byte address 0x4 - core index']
  #allocation1 [shape = 'u32[144,128]{1,0:T(1,128)}', space=vmem, size = 0x12000, scoped, tag = 'internal scratch']
  %s0 = inlined_call_operand.hbm [shape: f32[2,8,512], index: 0, kind: input, shape index: {}]
  %s1 = inlined_call_operand.hbm [shape: f32[2,4,512], index: 1, kind: input, shape index: {}]
  %s2 = inlined_call_operand.hbm [shape: f32[2,4,512], index: 2, kind: input, shape index: {}]
  %s3 = inlined_call_operand.vmem [shape: s32[2,1,512], index: 3, kind: input, shape index: {}]
  %s4 = inlined_call_operand.hbm [shape: f32[1,4,512], index: 4, kind: input, shape index: {}]
  %s5 = inlined_call_operand.hbm [shape: f32[2,1,512], index: 5, kind: output, shape index: {0}]
  %s6 = inlined_call_operand.hbm [shape: f32[2,1,512], index: 6, kind: output, shape index: {1}]
  %s7 = inlined_call_operand.hbm [shape: f32[2,1,512], index: 7, kind: output, shape index: {2}]
  %8 = xla_tuple %s5, %s6, %s7
  %s9 = sld [smem:[#allocation0]]
  $region85: #{tpu_custom_call.1} parent=0
    _
  %s11 = ssub.s32 1, %s9
  %s12 = scalar_select 0, %s11, %s9
  $region1: #{tpu_custom_call.1} parent=0
    #allocation2 [shape = 'u8[16384]{0}', space=vmem, size = 0x4000, scoped, tag = 'input window, operand 0']
    #allocation3 [shape = 's32[2]{0}', space=sflag, size = 0x8, scoped, tag = 'scoped memory for tpu_custom_call.1']
    #allocation4 [shape = 's32[2]{0}', space=sflag, size = 0x8, scoped, tag = 'scoped memory for tpu_custom_call.1']
    #allocation5 [shape = 'u8[8192]{0}', space=vmem, size = 0x2000, scoped, tag = 'input window, operand 1']
    #allocation6 [shape = 's32[2]{0}', space=sflag, size = 0x8, scoped, tag = 'scoped memory for tpu_custom_call.1']
    #allocation7 [shape = 'u8[8192]{0}', space=vmem, size = 0x2000, scoped, tag = 'input window, operand 2']
    #allocation8 [shape = 'u8[8192]{0}', space=vmem, size = 0x2000, scoped, tag = 'input window, operand 4']
    #allocation9 [shape = 's32[2]{0}', space=sflag, size = 0x8, scoped, tag = 'scoped memory for tpu_custom_call.1']
    #allocation10 [shape = 'u8[2048]{0}', space=vmem, size = 0x800, scoped, tag = 'output window, operand 0']
    #allocation11 [shape = 'u8[2048]{0}', space=vmem, size = 0x800, scoped, tag = 'output window, operand 1']
    #allocation12 [shape = 's32[2]{0}', space=sflag, size = 0x8, scoped, tag = 'scoped memory for tpu_custom_call.1']
    #allocation13 [shape = 'u8[2048]{0}', space=vmem, size = 0x800, scoped, tag = 'output window, operand 2']
    %13 = vsyncpa [#allocation3], 0
    %s14 = scalar_lea.sflag [#allocation3], 1
    %15 = vsyncpa %s14, 0
    %16 = vsyncpa [#allocation6], 0
    %s17 = scalar_lea.sflag [#allocation6], 1
    %18 = vsyncpa %s17, 0
    %19 = vsyncpa [#allocation9], 0
    %s20 = scalar_lea.sflag [#allocation9], 1
    %21 = vsyncpa %s20, 0
    %22 = vsyncpa [#allocation4], 0
    %s23 = scalar_lea.sflag [#allocation4], 1
    %24 = vsyncpa %s23, 0
    %25 = vsyncpa [#allocation12], 0
    %s26 = scalar_lea.sflag [#allocation12], 1
    %27 = vsyncpa %s26, 0
    loop: start=0, step=1, limit=6
    $region2: #{tpu_custom_call.1} parent=1 // loop_pre_header
      _
    $region3: #{tpu_custom_call.1} parent=1 // loop_header
      %s29 = sphi 0, %s33
      %p30 = scmp.ge.s32.totalorder %s29, 6
      %s36 = sphi 0, %s48
      %s37 = sphi 0, %s44
      %s38 = sphi 0, %s36
      %s39 = sphi 0, %s37
      %s40 = sphi 0, %s38
      %s41 = sphi 0, %s39
      %s53 = sphi 0, %s55
      %s56 = sphi 0, %s53
      %s57 = sphi 0, %s56
      %s73 = sphi 0, %s57
      %s81 = sphi 0, %s83
      %s84 = sphi 0, %s81
      %s85 = sphi 0, %s84
      %s101 = sphi 0, %s85
      %s109 = sphi 0, %s111
      %s112 = sphi 0, %s109
      %s113 = sphi 0, %s112
      %s129 = sphi 0, %s113
      %s137 = sphi 0, %s139
      %s140 = sphi 0, %s137
      %s141 = sphi 0, %s140
      %s157 = sphi 0, %s141
      %s163 = sphi 0, %s165
      %s166 = sphi 0, %s163
      %s167 = sphi 0, %s166
      %s183 = sphi 0, %s167
      %s191 = sphi 0, %s193
      %s194 = sphi 0, %s191
      %s195 = sphi 0, %s194
      %s211 = sphi 0, %s195
      %s219 = sphi 0, %s221
      %s222 = sphi 0, %s219
      %s223 = sphi 0, %s222
      %s239 = sphi 0, %s223
      %s247 = sphi 0, %s249
      %s250 = sphi 0, %s247
      %s251 = sphi 0, %s250
      %s267 = sphi 0, %s251
    $region4: #{tpu_custom_call.1} parent=1 // loop_header_branch
      %32 = sbr.rel (%p30) target = $region8
    $region5: #{tpu_custom_call.1} parent=1 // loop_body
      %s34 = ssub.s32 %s29, 1
      %s35 = ssub.s32 %s29, 2
      %s42 = sadd.s32 1, %s37
      %p43 = scmp.ge.s32.totalorder %s42, 2
      %s44 = scalar_select %p43, 0, %s42
      %s45 = sadd.s32 1, %s36
      %s46 = scalar_select %p43, %s45, %s36
      %p47 = scmp.ge.s32.totalorder %s46, 2
      %s48 = scalar_select %p47, 0, %s46
      %s49 = ssub.s32 %s36, %s48
      %s50 = ssub.s32 %s37, %s44
      %s51 = sor.u32 %s49, %s50
      %p52 = scmp.eq.s32.totalorder %s51, 0
      %s54 = sadd.s32 %s53, 1
      %s55 = scalar_select %p52, %s53, %s54
      %p58 = pneg %p52
      %p59 = scmp.eq.s32.totalorder %s29, 3
      %p60 = por %p58, %p59
      %p61 = scmp.ne.s32.totalorder %s53, %s56
      %p62 = scmp.eq.s32.totalorder %s29, 0
      %p63 = por %p61, %p62
      %p64 = scmp.ne.s32.totalorder %s53, %s56
      %p65 = scmp.eq.s32.totalorder %s34, 3
      %p66 = por %p64, %p65
      %p67 = scmp.ne.s32.totalorder %s56, %s57
      %p68 = scmp.eq.s32.totalorder %s34, 0
      %p69 = por %p67, %p68
      %p70 = scmp.ne.s32.totalorder %s56, %s57
      %p71 = scmp.eq.s32.totalorder %s35, 3
      %p72 = por %p70, %p71
      %p74 = scmp.ne.s32.totalorder %s57, %s73
      %p75 = scmp.eq.s32.totalorder %s35, 0
      %p76 = por %p74, %p75
      %s77 = ssub.s32 %s36, %s48
      %s78 = ssub.s32 %s37, %s44
      %s79 = sor.u32 %s77, %s78
      %p80 = scmp.eq.s32.totalorder %s79, 0
      %s82 = sadd.s32 %s81, 1
      %s83 = scalar_select %p80, %s81, %s82
      %p86 = pneg %p80
      %p87 = scmp.eq.s32.totalorder %s29, 3
      %p88 = por %p86, %p87
      %p89 = scmp.ne.s32.totalorder %s81, %s84
      %p90 = scmp.eq.s32.totalorder %s29, 0
      %p91 = por %p89, %p90
      %p92 = scmp.ne.s32.totalorder %s81, %s84
      %p93 = scmp.eq.s32.totalorder %s34, 3
      %p94 = por %p92, %p93
      %p95 = scmp.ne.s32.totalorder %s84, %s85
      %p96 = scmp.eq.s32.totalorder %s34, 0
      %p97 = por %p95, %p96
      %p98 = scmp.ne.s32.totalorder %s84, %s85
      %p99 = scmp.eq.s32.totalorder %s35, 3
      %p100 = por %p98, %p99
      %p102 = scmp.ne.s32.totalorder %s85, %s101
      %p103 = scmp.eq.s32.totalorder %s35, 0
      %p104 = por %p102, %p103
      %s105 = ssub.s32 %s36, %s48
      %s106 = ssub.s32 %s37, %s44
      %s107 = sor.u32 %s105, %s106
      %p108 = scmp.eq.s32.totalorder %s107, 0
      %s110 = sadd.s32 %s109, 1
      %s111 = scalar_select %p108, %s109, %s110
      %p114 = pneg %p108
      %p115 = scmp.eq.s32.totalorder %s29, 3
      %p116 = por %p114, %p115
      %p117 = scmp.ne.s32.totalorder %s109, %s112
      %p118 = scmp.eq.s32.totalorder %s29, 0
      %p119 = por %p117, %p118
      %p120 = scmp.ne.s32.totalorder %s109, %s112
      %p121 = scmp.eq.s32.totalorder %s34, 3
      %p122 = por %p120, %p121
      %p123 = scmp.ne.s32.totalorder %s112, %s113
      %p124 = scmp.eq.s32.totalorder %s34, 0
      %p125 = por %p123, %p124
      %p126 = scmp.ne.s32.totalorder %s112, %s113
      %p127 = scmp.eq.s32.totalorder %s35, 3
      %p128 = por %p126, %p127
      %p130 = scmp.ne.s32.totalorder %s113, %s129
      %p131 = scmp.eq.s32.totalorder %s35, 0
      %p132 = por %p130, %p131
      %s133 = ssub.s32 %s36, %s48
      %s134 = ssub.s32 %s37, %s44
      %s135 = sor.u32 %s133, %s134
      %p136 = scmp.eq.s32.totalorder %s135, 0
      %s138 = sadd.s32 %s137, 1
      %s139 = scalar_select %p136, %s137, %s138
      %p142 = pneg %p136
      %p143 = scmp.eq.s32.totalorder %s29, 3
      %p144 = por %p142, %p143
      %p145 = scmp.ne.s32.totalorder %s137, %s140
      %p146 = scmp.eq.s32.totalorder %s29, 0
      %p147 = por %p145, %p146
      %p148 = scmp.ne.s32.totalorder %s137, %s140
      %p149 = scmp.eq.s32.totalorder %s34, 3
      %p150 = por %p148, %p149
      %p151 = scmp.ne.s32.totalorder %s140, %s141
      %p152 = scmp.eq.s32.totalorder %s34, 0
      %p153 = por %p151, %p152
      %p154 = scmp.ne.s32.totalorder %s140, %s141
      %p155 = scmp.eq.s32.totalorder %s35, 3
      %p156 = por %p154, %p155
      %p158 = scmp.ne.s32.totalorder %s141, %s157
      %p159 = scmp.eq.s32.totalorder %s35, 0
      %p160 = por %p158, %p159
      %s161 = ssub.s32 %s37, %s44
      %p162 = scmp.eq.s32.totalorder %s161, 0
      %s164 = sadd.s32 %s163, 1
      %s165 = scalar_select %p162, %s163, %s164
      %p168 = pneg %p162
      %p169 = scmp.eq.s32.totalorder %s29, 3
      %p170 = por %p168, %p169
      %p171 = scmp.ne.s32.totalorder %s163, %s166
      %p172 = scmp.eq.s32.totalorder %s29, 0
      %p173 = por %p171, %p172
      %p174 = scmp.ne.s32.totalorder %s163, %s166
      %p175 = scmp.eq.s32.totalorder %s34, 3
      %p176 = por %p174, %p175
      %p177 = scmp.ne.s32.totalorder %s166, %s167
      %p178 = scmp.eq.s32.totalorder %s34, 0
      %p179 = por %p177, %p178
      %p180 = scmp.ne.s32.totalorder %s166, %s167
      %p181 = scmp.eq.s32.totalorder %s35, 3
      %p182 = por %p180, %p181
      %p184 = scmp.ne.s32.totalorder %s167, %s183
      %p185 = scmp.eq.s32.totalorder %s35, 0
      %p186 = por %p184, %p185
      %s187 = ssub.s32 %s36, %s48
      %s188 = ssub.s32 %s37, %s44
      %s189 = sor.u32 %s187, %s188
      %p190 = scmp.eq.s32.totalorder %s189, 0
      %s192 = sadd.s32 %s191, 1
      %s193 = scalar_select %p190, %s191, %s192
      %p196 = pneg %p190
      %p197 = scmp.eq.s32.totalorder %s29, 3
      %p198 = por %p196, %p197
      %p199 = scmp.ne.s32.totalorder %s191, %s194
      %p200 = scmp.eq.s32.totalorder %s29, 0
      %p201 = por %p199, %p200
      %p202 = scmp.ne.s32.totalorder %s191, %s194
      %p203 = scmp.eq.s32.totalorder %s34, 3
      %p204 = por %p202, %p203
      %p205 = scmp.ne.s32.totalorder %s194, %s195
      %p206 = scmp.eq.s32.totalorder %s34, 0
      %p207 = por %p205, %p206
      %p208 = scmp.ne.s32.totalorder %s194, %s195
      %p209 = scmp.eq.s32.totalorder %s35, 3
      %p210 = por %p208, %p209
      %p212 = scmp.ne.s32.totalorder %s195, %s211
      %p213 = scmp.eq.s32.totalorder %s35, 0
      %p214 = por %p212, %p213
      %s215 = ssub.s32 %s36, %s48
      %s216 = ssub.s32 %s37, %s44
      %s217 = sor.u32 %s215, %s216
      %p218 = scmp.eq.s32.totalorder %s217, 0
      %s220 = sadd.s32 %s219, 1
      %s221 = scalar_select %p218, %s219, %s220
      %p224 = pneg %p218
      %p225 = scmp.eq.s32.totalorder %s29, 3
      %p226 = por %p224, %p225
      %p227 = scmp.ne.s32.totalorder %s219, %s222
      %p228 = scmp.eq.s32.totalorder %s29, 0
      %p229 = por %p227, %p228
      %p230 = scmp.ne.s32.totalorder %s219, %s222
      %p231 = scmp.eq.s32.totalorder %s34, 3
      %p232 = por %p230, %p231
      %p233 = scmp.ne.s32.totalorder %s222, %s223
      %p234 = scmp.eq.s32.totalorder %s34, 0
      %p235 = por %p233, %p234
      %p236 = scmp.ne.s32.totalorder %s222, %s223
      %p237 = scmp.eq.s32.totalorder %s35, 3
      %p238 = por %p236, %p237
      %p240 = scmp.ne.s32.totalorder %s223, %s239
      %p241 = scmp.eq.s32.totalorder %s35, 0
      %p242 = por %p240, %p241
      %s243 = ssub.s32 %s36, %s48
      %s244 = ssub.s32 %s37, %s44
      %s245 = sor.u32 %s243, %s244
      %p246 = scmp.eq.s32.totalorder %s245, 0
      %s248 = sadd.s32 %s247, 1
      %s249 = scalar_select %p246, %s247, %s248
      %p252 = pneg %p246
      %p253 = scmp.eq.s32.totalorder %s29, 3
      %p254 = por %p252, %p253
      %p255 = scmp.ne.s32.totalorder %s247, %s250
      %p256 = scmp.eq.s32.totalorder %s29, 0
      %p257 = por %p255, %p256
      %p258 = scmp.ne.s32.totalorder %s247, %s250
      %p259 = scmp.eq.s32.totalorder %s34, 3
      %p260 = por %p258, %p259
      %p261 = scmp.ne.s32.totalorder %s250, %s251
      %p262 = scmp.eq.s32.totalorder %s34, 0
      %p263 = por %p261, %p262
      %p264 = scmp.ne.s32.totalorder %s250, %s251
      %p265 = scmp.eq.s32.totalorder %s35, 3
      %p266 = por %p264, %p265
      %p268 = scmp.ne.s32.totalorder %s251, %s267
      %p269 = scmp.eq.s32.totalorder %s35, 0
      %p270 = por %p268, %p269
      %p271 = scmp.le.s32.totalorder 1, %s29
      %p272 = scmp.lt.s32.totalorder %s29, 5
      %p273 = pnand %p271, %p272
      %p274 = pneg %p273
      // Predicated region
      $region9: #{tpu_custom_call.1} parent=5 // pred_check
        _
      $region10: #{tpu_custom_call.1} parent=5 // pred_check_branch
        %276 = sbr.rel (%p273) target = $region12
      $region11: #{tpu_custom_call.1} parent=5 // pred_region
        %s277 = ssub.s32 %s29, 1
      $region12: #{tpu_custom_call.1} parent=5 // pred_fallthru
        _
      %p278 = scmp.lt.s32.totalorder %s29, 4
      // Predicated region
      $region13: #{tpu_custom_call.1} parent=5 // pred_check
        %p279 = pneg %p278
      $region14: #{tpu_custom_call.1} parent=5 // pred_check_branch
        %281 = sbr.rel (%p279) target = $region16
      $region15: #{tpu_custom_call.1} parent=5 // pred_region
        // Predicated region
        $region17: #{tpu_custom_call.1} parent=15 // pred_check
          %p282 = pneg %p63
        $region18: #{tpu_custom_call.1} parent=15 // pred_check_branch
          %284 = sbr.rel (%p282) target = $region20
        $region19: #{tpu_custom_call.1} parent=15 // pred_region
          %s285 = sand.u32 %s53, 1
          %s286 = scalar_lea.sflag [#allocation3], %s285
          %s287 = sand.u32 %s53, 1
          %s288 = smul.addr %s287, 16
          %s289 = scalar_lea.vmem [#allocation2], %s288
          %s290 = smul.u32 2, %s37
          %s292 = ssub.s32 256, 256
          %293 = vsyncadd %s286, %s292
          %s294 = smul.addr %s36, 4
          %s295 = sadd.s32 %s290, %s294
          %s296 = smul.addr %s295, 128
          %s297 = scalar_lea.hbm %s0, %s296
          %s299 = sshll.u32 %s289, 4
          %s300 = int_to_ptr.vmem [resolvable:$true] %s299
          %302 = dma.hbm_to_vmem [thread:$0]  %s297, 256, %s300, %s286
        $region20: #{tpu_custom_call.1} parent=15 // pred_fallthru
          _
        // Predicated region
        $region21: #{tpu_custom_call.1} parent=15 // pred_check
          %p303 = pneg %p91
        $region22: #{tpu_custom_call.1} parent=15 // pred_check_branch
          %305 = sbr.rel (%p303) target = $region24
        $region23: #{tpu_custom_call.1} parent=15 // pred_region
          %s306 = sand.u32 %s29, 1
          %s307 = scalar_lea.sflag [#allocation6], %s306
          %s308 = sand.u32 %s81, 1
          %s309 = smul.addr %s308, 8
          %s310 = scalar_lea.vmem [#allocation5], %s309
          %s311 = smul.u32 2, %s37
          %s313 = ssub.s32 128, 128
          %314 = vsyncadd %s307, %s313
          %s315 = smul.addr %s36, 4
          %s316 = sadd.s32 %s311, %s315
          %s317 = smul.addr %s316, 64
          %s318 = scalar_lea.hbm %s1, %s317
          %s320 = sshll.u32 %s310, 4
          %s321 = int_to_ptr.vmem [resolvable:$true] %s320
          %323 = dma.hbm_to_vmem [thread:$0]  %s318, 128, %s321, %s307
        $region24: #{tpu_custom_call.1} parent=15 // pred_fallthru
          _
        // Predicated region
        $region25: #{tpu_custom_call.1} parent=15 // pred_check
          %p324 = pneg %p119
        $region26: #{tpu_custom_call.1} parent=15 // pred_check_branch
          %326 = sbr.rel (%p324) target = $region28
        $region27: #{tpu_custom_call.1} parent=15 // pred_region
          %s327 = sand.u32 %s29, 1
          %s328 = scalar_lea.sflag [#allocation6], %s327
          %s329 = sand.u32 %s109, 1
          %s330 = smul.addr %s329, 8
          %s331 = scalar_lea.vmem [#allocation7], %s330
          %s332 = smul.u32 2, %s37
          %s334 = ssub.s32 128, 128
          %335 = vsyncadd %s328, %s334
          %s336 = smul.addr %s36, 4
          %s337 = sadd.s32 %s332, %s336
          %s338 = smul.addr %s337, 64
          %s339 = scalar_lea.hbm %s2, %s338
          %s341 = sshll.u32 %s331, 4
          %s342 = int_to_ptr.vmem [resolvable:$true] %s341
          %344 = dma.hbm_to_vmem [thread:$0]  %s339, 128, %s342, %s328
        $region28: #{tpu_custom_call.1} parent=15 // pred_fallthru
          _
        // Predicated region
        $region29: #{tpu_custom_call.1} parent=15 // pred_check
          %p345 = pneg %p147
        $region30: #{tpu_custom_call.1} parent=15 // pred_check_branch
          %347 = sbr.rel (%p345) target = $region32
        $region31: #{tpu_custom_call.1} parent=15 // pred_region
          %s348 = smul.u32 2, %s37
          %p349 = scmp.lt.s32.totalorder %s36, 1
          %s350 = scalar_select %p349, %s36, 1
          %p351 = scmp.lt.s32.totalorder %s348, 3
          %s352 = scalar_select %p351, %s348, 3
          %s353 = smul.addr %s350, 4
          %s354 = sadd.s32 %s352, %s353
          %s355 = scalar_lea.vmem %s3, %s354
          %s356 = smul.u32 2, %s37
        $region32: #{tpu_custom_call.1} parent=15 // pred_fallthru
          _
        // Predicated region
        $region33: #{tpu_custom_call.1} parent=15 // pred_check
          %p357 = pneg %p173
        $region34: #{tpu_custom_call.1} parent=15 // pred_check_branch
          %359 = sbr.rel (%p357) target = $region36
        $region35: #{tpu_custom_call.1} parent=15 // pred_region
          %s360 = sand.u32 %s163, 1
          %s361 = scalar_lea.sflag [#allocation9], %s360
          %s362 = sand.u32 %s163, 1
          %s363 = smul.addr %s362, 8
          %s364 = scalar_lea.vmem [#allocation8], %s363
          %s365 = smul.u32 2, %s37
          %s367 = ssub.s32 128, 128
          %368 = vsyncadd %s361, %s367
          %s369 = smul.addr %s365, 64
          %s370 = scalar_lea.hbm %s4, %s369
          %s372 = sshll.u32 %s364, 4
          %s373 = int_to_ptr.vmem [resolvable:$true] %s372
          %375 = dma.hbm_to_vmem [thread:$0]  %s370, 128, %s373, %s361
        $region36: #{tpu_custom_call.1} parent=15 // pred_fallthru
          _
      $region16: #{tpu_custom_call.1} parent=5 // pred_fallthru
        _
      %p376 = scmp.le.s32.totalorder 1, %s29
      %p377 = scmp.lt.s32.totalorder %s29, 5
      %p378 = pnand %p376, %p377
      %p379 = pneg %p378
      // Predicated region
      $region37: #{tpu_custom_call.1} parent=5 // pred_check
        _
      $region38: #{tpu_custom_call.1} parent=5 // pred_check_branch
        %381 = sbr.rel (%p378) target = $region40
      $region39: #{tpu_custom_call.1} parent=5 // pred_region
        %s382 = ssub.s32 %s29, 1
        %s383 = sand.u32 %s56, 1
        %s384 = scalar_lea.sflag [#allocation3], %s383
        %s385 = sand.u32 %s56, 1
        %s386 = smul.addr %s385, 16
        %s387 = scalar_lea.vmem [#allocation2], %s386
        // Predicated region
        $region41: #{tpu_custom_call.1} parent=39 // pred_check
          %p388 = pneg %p69
        $region42: #{tpu_custom_call.1} parent=39 // pred_check_branch
          %390 = sbr.rel (%p388) target = $region44
        $region43: #{tpu_custom_call.1} parent=39 // pred_region
          %391 = dma.done %s384, 256
        $region44: #{tpu_custom_call.1} parent=39 // pred_fallthru
          _
        %s392 = sand.u32 %s34, 1
        %s393 = scalar_lea.sflag [#allocation6], %s392
        %s394 = sand.u32 %s84, 1
        %s395 = smul.addr %s394, 8
        %s396 = scalar_lea.vmem [#allocation5], %s395
        // Predicated region
        $region45: #{tpu_custom_call.1} parent=39 // pred_check
          %p397 = pneg %p97
        $region46: #{tpu_custom_call.1} parent=39 // pred_check_branch
          %399 = sbr.rel (%p397) target = $region48
        $region47: #{tpu_custom_call.1} parent=39 // pred_region
          %400 = dma.done %s393, 128
        $region48: #{tpu_custom_call.1} parent=39 // pred_fallthru
          _
        %s401 = sand.u32 %s34, 1
        %s402 = scalar_lea.sflag [#allocation6], %s401
        %s403 = sand.u32 %s112, 1
        %s404 = smul.addr %s403, 8
        %s405 = scalar_lea.vmem [#allocation7], %s404
        // Predicated region
        $region49: #{tpu_custom_call.1} parent=39 // pred_check
          %p406 = pneg %p125
        $region50: #{tpu_custom_call.1} parent=39 // pred_check_branch
          %408 = sbr.rel (%p406) target = $region52
        $region51: #{tpu_custom_call.1} parent=39 // pred_region
          %409 = dma.done %s402, 128
        $region52: #{tpu_custom_call.1} parent=39 // pred_fallthru
          _
        %s410 = sand.u32 %s166, 1
        %s411 = scalar_lea.sflag [#allocation9], %s410
        %s412 = sand.u32 %s166, 1
        %s413 = smul.addr %s412, 8
        %s414 = scalar_lea.vmem [#allocation8], %s413
        // Predicated region
        $region53: #{tpu_custom_call.1} parent=39 // pred_check
          %p415 = pneg %p179
        $region54: #{tpu_custom_call.1} parent=39 // pred_check_branch
          %417 = sbr.rel (%p415) target = $region56
        $region55: #{tpu_custom_call.1} parent=39 // pred_region
          %418 = dma.done %s411, 128
        $region56: #{tpu_custom_call.1} parent=39 // pred_fallthru
          _
        %s419 = sand.u32 %s56, 1
        %s420 = scalar_lea.sflag [#allocation3], %s419
        %s421 = sand.u32 %s56, 1
        %s422 = smul.addr %s421, 16
        %s423 = scalar_lea.vmem [#allocation2], %s422
        %p424 = pneg %p69
        %p425 = pneg %p66
        %s426 = sand.u32 %s34, 1
        %s427 = scalar_lea.sflag [#allocation6], %s426
        %s428 = sand.u32 %s84, 1
        %s429 = smul.addr %s428, 8
        %s430 = scalar_lea.vmem [#allocation5], %s429
        %p431 = pneg %p97
        %p432 = pneg %p94
        %s433 = sand.u32 %s34, 1
        %s434 = scalar_lea.sflag [#allocation6], %s433
        %s435 = sand.u32 %s112, 1
        %s436 = smul.addr %s435, 8
        %s437 = scalar_lea.vmem [#allocation7], %s436
        %p438 = pneg %p125
        %p439 = pneg %p122
        %s440 = smul.u32 2, %s39
        %p441 = scmp.lt.s32.totalorder %s38, 1
        %s442 = scalar_select %p441, %s38, 1
        %p443 = scmp.lt.s32.totalorder %s440, 3
        %s444 = scalar_select %p443, %s440, 3
        %s445 = smul.addr %s442, 4
        %s446 = sadd.s32 %s444, %s445
        %s447 = scalar_lea.vmem %s3, %s446
        %p448 = pneg %p153
        %p449 = pneg %p150
        %s450 = sand.u32 %s166, 1
        %s451 = scalar_lea.sflag [#allocation9], %s450
        %s452 = sand.u32 %s166, 1
        %s453 = smul.addr %s452, 8
        %s454 = scalar_lea.vmem [#allocation8], %s453
        %p455 = pneg %p179
        %p456 = pneg %p176
        %p457 = pneg %p207
        %p458 = pneg %p204
        %s459 = sand.u32 %s194, 1
        %s460 = scalar_lea.sflag [#allocation4], %s459
        %s461 = sand.u32 %s194, 1
        %s462 = smul.addr %s461, 2
        %s463 = scalar_lea.vmem [#allocation10], %s462
        %p464 = pneg %p235
        %p465 = pneg %p232
        %s466 = sand.u32 %s34, 1
        %s467 = scalar_lea.sflag [#allocation12], %s466
        %s468 = sand.u32 %s222, 1
        %s469 = smul.addr %s468, 2
        %s470 = scalar_lea.vmem [#allocation11], %s469
        %p471 = pneg %p263
        %p472 = pneg %p260
        %s473 = sand.u32 %s34, 1
        %s474 = scalar_lea.sflag [#allocation12], %s473
        %s475 = sand.u32 %s250, 1
        %s476 = smul.addr %s475, 2
        %s477 = scalar_lea.vmem [#allocation13], %s476
        %s478 = smul.u32 2, %s39
        %s479 = smul.u32 2, %s39
        %s480 = smul.u32 2, %s39
        %s481 = smul.u32 2, %s39
        %p482 = scmp.lt.s32.totalorder %s38, 1
        %s483 = scalar_select %p482, %s38, 1
        %p484 = scmp.lt.s32.totalorder %s481, 3
        %s485 = scalar_select %p484, %s481, 3
        %s486 = smul.addr %s483, 4
        %s487 = sadd.s32 %s485, %s486
        %s488 = scalar_lea.vmem %s3, %s487
        %s489 = smul.u32 2, %s39
        %s490 = smul.u32 2, %s39
        %s491 = smul.u32 2, %s39
        %s492 = smul.u32 2, %s39
        %s493 = smul.u32 2, %s39
        %v494 = vld [vmem:[%s387] sm:$0xff]
        %v495 = vld [vmem:[%s387 + $0x8] sm:$0xff]
        %v496 = vld [vmem:[%s488] sm:$0x3]
        %v497 = vrot.slane %v494, 4
        %v498 = vmax.f32 %v494, %v497
        %v499 = vrot.slane %v498, 2
        %v500 = vmax.f32 %v498, %v499
        %v501 = vrot.slane %v500, 1
        %v502 = vmax.f32 %v500, %v501
        %v503 = vrot.slane %v495, 4
        %v504 = vmax.f32 %v495, %v503
        %v505 = vrot.slane %v504, 2
        %v506 = vmax.f32 %v504, %v505
        %v507 = vrot.slane %v506, 1
        %v508 = vmax.f32 %v506, %v507
        %v509 = vsub.f32 %v494, %v502
        %v510 = vsub.f32 %v495, %v508
        %v511 = vmul.f32 %v509, 1.442695
        %v512 = vpow.pop %v511
        %v513 = vmul.f32 %v510, 1.442695
        %v514 = vpow.pop %v513
        %v515 = vrot.slane %v512, 4
        %v516 = vadd.f32 %v512, %v515
        %v517 = vrot.slane %v516, 2
        %v518 = vadd.f32 %v516, %v517
        %v519 = vrot.slane %v518, 1
        %v520 = vadd.f32 %v518, %v519
        %v521 = vrot.slane %v514, 4
        %v522 = vadd.f32 %v514, %v521
        %v523 = vrot.slane %v522, 2
        %v524 = vadd.f32 %v522, %v523
        %v525 = vrot.slane %v524, 1
        %v526 = vadd.f32 %v524, %v525
        %v527 = vlog2.pop %v520
        %v528 = vmul.f32 %v527, 0.6931472
        %v529 = vlog2.pop %v526
        %v530 = vmul.f32 %v529, 0.6931472
        %v531 = vadd.f32 %v502, %v528
        %v532 = vadd.f32 %v508, %v530
        %v533 = vsub.f32 %v531, %v494
        %v534 = vsub.f32 %v532, %v495
        %vm535 = vcmp.gt.s32.totalorder %v496, 0
        %v538 = vcombine.low %v533, %v534
        %v540 = vunpack.c.l.s4 1966171168
        %v541 = vunpack.c.0.s8 %v540
        %v542 = vlaneseq
        %v543 = vshrl.u32 %v542, 7
        %v544 = vsub.s32 %v541, %v543
        %v545 = vrot.slane %v538, %v544
        %v547 = vunpack.c.l.s4 1966171168
        %v548 = vunpack.c.0.s8 %v547
        %v549 = vlaneseq
        %v550 = vshrl.u32 %v549, 7
        %v551 = vsub.s32 %v548, %v550
        %v552 = vrot.slane %v545, %v551
        %v554 = vsel %vm535, -inf, %v552
        %v555 = vlaneseq
        %vm556 = vcmp.ge.s32.totalorder %v555, 0
        %vm557 = vcmp.lt.s32.totalorder %v555, 256
        %vm558 = vmand %vm556, %vm557
        %559 = vst.msk [vmem:[%s463] sm:$0x3] %vm558, %v554
        %v560 = vlaneseq
        %v561 = vshrl.u32 %v560, 7
        %v562 = vlaneseq
        %v563 = vshrl.u32 %v562, 7
        %v564 = vsub.s32 0, %v563
        %v565 = vrot.slane %v496, %v564
        %v566 = vlaneseq
        %v567 = vshrl.u32 %v566, 7
        %v568 = vsub.s32 1, %v567
        %v569 = vrot.slane %v496, %v568
        %vm570 = vcmp.eq.s32.totalorder %v561, %v565
        %vm571 = vcmp.eq.s32.totalorder %v561, %v569
        %v572 = vsel %vm570, %v494, 0.0
        %v573 = vsel %vm571, %v495, 0.0
        %v574 = vrot.slane %v572, 4
        %v575 = vadd.f32 %v572, %v574
        %v576 = vrot.slane %v575, 2
        %v577 = vadd.f32 %v575, %v576
        %v578 = vrot.slane %v577, 1
        %v579 = vadd.f32 %v577, %v578
        %v580 = vrot.slane %v573, 4
        %v581 = vadd.f32 %v573, %v580
        %v582 = vrot.slane %v581, 2
        %v583 = vadd.f32 %v581, %v582
        %v584 = vrot.slane %v583, 1
        %v585 = vadd.f32 %v583, %v584
        %v586 = vsub.f32 %v531, %v579
        %v587 = vsub.f32 %v532, %v585
        %v590 = vcombine.low %v586, %v587
        %v592 = vunpack.c.l.s4 1966171168
        %v593 = vunpack.c.0.s8 %v592
        %v594 = vlaneseq
        %v595 = vshrl.u32 %v594, 7
        %v596 = vsub.s32 %v593, %v595
        %v597 = vrot.slane %v590, %v596
        %v599 = vunpack.c.l.s4 1966171168
        %v600 = vunpack.c.0.s8 %v599
        %v601 = vlaneseq
        %v602 = vshrl.u32 %v601, 7
        %v603 = vsub.s32 %v600, %v602
        %v604 = vrot.slane %v597, %v603
        %606 = vst.msk [vmem:[%s470] sm:$0x3] %vm558, %v604
        %v607 = vld [vmem:[%s396] sm:$0xff]
        %v608 = vld [vmem:[%s405] sm:$0xff]
        %v609 = vld [vmem:[%s414] sm:$0xff]
        %v610 = vsub.f32 %v608, %v609
        %v611 = vmul.f32 %v610, 10.0
        %v613 = vrot.slane %v609, 6
        %v614 = vrot.slane %v613, 4
        %v616 = vrcp.pop %v614
        %v617 = vmul.f32 %v611, %v616
        %v618 = vrcp.pop %v609
        %v619 = vmul.f32 %v608, %v618
        %v620 = vlog2.pop %v619
        %v621 = vmul.f32 %v620, 0.6931472
        %v622 = vmul.f32 %v621, 5.0
        %v623 = vsub.f32 %v607, %v617
        %v624 = vand.u32 2147483647, %v623
        %vm625 = vcmp.lt.f32.partialorder %v624, 1.0
        %v626 = vmul.f32 %v623, 0.5
        %v627 = vmul.f32 %v626, %v623
        %v628 = vsub.f32 %v624, 0.5
        %v629 = vsel %vm625, %v627, %v628
        %v631 = vcombine.high %v629, %v629
        %vm633 = vcmask 1041408
        %v634 = vsel %vm633, %v629, 0.0
        %v635 = vrot.slane %v634, 4
        %v636 = vadd.f32 %v634, %v635
        %v637 = vrot.slane %v636, 2
        %v638 = vadd.f32 %v636, %v637
        %v639 = vrot.slane %v638, 1
        %v640 = vadd.f32 %v638, %v639
        %v641 = vsel %vm633, %v631, 0.0
        %v642 = vrot.slane %v641, 4
        %v643 = vadd.f32 %v641, %v642
        %v644 = vrot.slane %v643, 2
        %v645 = vadd.f32 %v643, %v644
        %v646 = vrot.slane %v645, 1
        %v647 = vadd.f32 %v645, %v646
        %v648 = vsub.f32 %v607, %v622
        %v649 = vand.u32 2147483647, %v648
        %vm650 = vcmp.lt.f32.partialorder %v649, 1.0
        %v651 = vmul.f32 %v648, 0.5
        %v652 = vmul.f32 %v651, %v648
        %v653 = vsub.f32 %v649, 0.5
        %v654 = vsel %vm650, %v652, %v653
        %v656 = vcombine.high %v654, %v654
        %v657 = vrot.slane %v654, 2
        %v658 = vrot.slane %v656, 2
        %v661 = vsel %vm633, %v657, 0.0
        %v662 = vrot.slane %v661, 4
        %v663 = vadd.f32 %v661, %v662
        %v664 = vrot.slane %v663, 2
        %v665 = vadd.f32 %v663, %v664
        %v666 = vrot.slane %v665, 1
        %v667 = vadd.f32 %v665, %v666
        %v668 = vsel %vm633, %v658, 0.0
        %v669 = vrot.slane %v668, 4
        %v670 = vadd.f32 %v668, %v669
        %v671 = vrot.slane %v670, 2
        %v672 = vadd.f32 %v670, %v671
        %v673 = vrot.slane %v672, 1
        %v674 = vadd.f32 %v672, %v673
        %v675 = vadd.f32 %v640, %v667
        %v676 = vadd.f32 %v647, %v674
        %v679 = vcombine.low %v675, %v676
        %v681 = vunpack.c.l.s4 1966171168
        %v682 = vunpack.c.0.s8 %v681
        %v683 = vlaneseq
        %v684 = vshrl.u32 %v683, 7
        %v685 = vsub.s32 %v682, %v684
        %v686 = vrot.slane %v679, %v685
        %v688 = vunpack.c.l.s4 1966171168
        %v689 = vunpack.c.0.s8 %v688
        %v690 = vlaneseq
        %v691 = vshrl.u32 %v690, 7
        %v692 = vsub.s32 %v689, %v691
        %v693 = vrot.slane %v686, %v692
        %v695 = vsel %vm535, %v693, 0.0
        %696 = vst.msk [vmem:[%s477] sm:$0x3] %vm558, %v695
        %s697 = sand.u32 %s194, 1
        %s698 = scalar_lea.sflag [#allocation4], %s697
        %s699 = sand.u32 %s194, 1
        %s700 = smul.addr %s699, 2
        %s701 = scalar_lea.vmem [#allocation10], %s700
        %s702 = sand.u32 %s34, 1
        %s703 = scalar_lea.sflag [#allocation12], %s702
        %s704 = sand.u32 %s222, 1
        %s705 = smul.addr %s704, 2
        %s706 = scalar_lea.vmem [#allocation11], %s705
        %s707 = sand.u32 %s34, 1
        %s708 = scalar_lea.sflag [#allocation12], %s707
        %s709 = sand.u32 %s250, 1
        %s710 = smul.addr %s709, 2
        %s711 = scalar_lea.vmem [#allocation13], %s710
        // Predicated region
        $region57: #{tpu_custom_call.1} parent=39 // pred_check
          %p712 = pneg %p204
        $region58: #{tpu_custom_call.1} parent=39 // pred_check_branch
          %714 = sbr.rel (%p712) target = $region60
        $region59: #{tpu_custom_call.1} parent=39 // pred_region
          %s715 = smul.u32 2, %s39
          %s717 = ssub.s32 32, 32
          %718 = vsyncadd %s698, %s717
          %s719 = smul.addr %s38, 4
          %s720 = sadd.s32 %s715, %s719
          %s721 = smul.addr %s720, 16
          %s722 = scalar_lea.hbm %s5, %s721
          %s724 = sshll.u32 %s701, 4
          %s725 = int_to_ptr.vmem [resolvable:$true] %s724
          %727 = dma.vmem_to_hbm [thread:$0]  %s725, 32, %s722, %s698
        $region60: #{tpu_custom_call.1} parent=39 // pred_fallthru
          _
        // Predicated region
        $region61: #{tpu_custom_call.1} parent=39 // pred_check
          %p728 = pneg %p232
        $region62: #{tpu_custom_call.1} parent=39 // pred_check_branch
          %730 = sbr.rel (%p728) target = $region64
        $region63: #{tpu_custom_call.1} parent=39 // pred_region
          %s731 = smul.u32 2, %s39
          %s733 = ssub.s32 32, 32
          %734 = vsyncadd %s703, %s733
          %s735 = smul.addr %s38, 4
          %s736 = sadd.s32 %s731, %s735
          %s737 = smul.addr %s736, 16
          %s738 = scalar_lea.hbm %s6, %s737
          %s740 = sshll.u32 %s706, 4
          %s741 = int_to_ptr.vmem [resolvable:$true] %s740
          %743 = dma.vmem_to_hbm [thread:$0]  %s741, 32, %s738, %s703
        $region64: #{tpu_custom_call.1} parent=39 // pred_fallthru
          _
        // Predicated region
        $region65: #{tpu_custom_call.1} parent=39 // pred_check
          %p744 = pneg %p260
        $region66: #{tpu_custom_call.1} parent=39 // pred_check_branch
          %746 = sbr.rel (%p744) target = $region68
        $region67: #{tpu_custom_call.1} parent=39 // pred_region
          %s747 = smul.u32 2, %s39
          %s749 = ssub.s32 32, 32
          %750 = vsyncadd %s708, %s749
          %s751 = smul.addr %s38, 4
          %s752 = sadd.s32 %s747, %s751
          %s753 = smul.addr %s752, 16
          %s754 = scalar_lea.hbm %s7, %s753
          %s756 = sshll.u32 %s711, 4
          %s757 = int_to_ptr.vmem [resolvable:$true] %s756
          %759 = dma.vmem_to_hbm [thread:$0]  %s757, 32, %s754, %s708
        $region68: #{tpu_custom_call.1} parent=39 // pred_fallthru
          _
      $region40: #{tpu_custom_call.1} parent=5 // pred_fallthru
        _
      %p760 = scmp.le.s32.totalorder 2, %s29
      // Predicated region
      $region69: #{tpu_custom_call.1} parent=5 // pred_check
        %p761 = pneg %p760
      $region70: #{tpu_custom_call.1} parent=5 // pred_check_branch
        %763 = sbr.rel (%p761) target = $region72
      $region71: #{tpu_custom_call.1} parent=5 // pred_region
        %s764 = ssub.s32 %s29, 2
        // Predicated region
        $region73: #{tpu_custom_call.1} parent=71 // pred_check
          %p765 = pneg %p210
        $region74: #{tpu_custom_call.1} parent=71 // pred_check_branch
          %767 = sbr.rel (%p765) target = $region76
        $region75: #{tpu_custom_call.1} parent=71 // pred_region
          %s768 = sand.u32 %s195, 1
          %s769 = scalar_lea.sflag [#allocation4], %s768
          %s770 = sand.u32 %s195, 1
          %s771 = smul.addr %s770, 2
          %s772 = scalar_lea.vmem [#allocation10], %s771
          %773 = dma.done %s769, 32
        $region76: #{tpu_custom_call.1} parent=71 // pred_fallthru
          _
        // Predicated region
        $region77: #{tpu_custom_call.1} parent=71 // pred_check
          %p774 = pneg %p238
        $region78: #{tpu_custom_call.1} parent=71 // pred_check_branch
          %776 = sbr.rel (%p774) target = $region80
        $region79: #{tpu_custom_call.1} parent=71 // pred_region
          %s777 = sand.u32 %s35, 1
          %s778 = scalar_lea.sflag [#allocation12], %s777
          %s779 = sand.u32 %s223, 1
          %s780 = smul.addr %s779, 2
          %s781 = scalar_lea.vmem [#allocation11], %s780
          %782 = dma.done %s778, 32
        $region80: #{tpu_custom_call.1} parent=71 // pred_fallthru
          _
        // Predicated region
        $region81: #{tpu_custom_call.1} parent=71 // pred_check
          %p783 = pneg %p266
        $region82: #{tpu_custom_call.1} parent=71 // pred_check_branch
          %785 = sbr.rel (%p783) target = $region84
        $region83: #{tpu_custom_call.1} parent=71 // pred_region
          %s786 = sand.u32 %s35, 1
          %s787 = scalar_lea.sflag [#allocation12], %s786
          %s788 = sand.u32 %s251, 1
          %s789 = smul.addr %s788, 2
          %s790 = scalar_lea.vmem [#allocation13], %s789
          %791 = dma.done %s787, 32
        $region84: #{tpu_custom_call.1} parent=71 // pred_fallthru
          _
      $region72: #{tpu_custom_call.1} parent=5 // pred_fallthru
        _
    $region6: #{tpu_custom_call.1} parent=1 // loop_footer
      %s33 = sadd.s32 1, %s29
    $region7: #{tpu_custom_call.1} parent=1 // loop_footer_branch
      %28 = sbr.rel target = $region3
    $region8: #{tpu_custom_call.1} parent=1 // loop_exit
      _
    %792 = vsyncpa [#allocation3], 1
    %s793 = scalar_lea.sflag [#allocation3], 1
    %794 = vsyncpa %s793, 1
    %795 = vsyncpa [#allocation6], 1
    %s796 = scalar_lea.sflag [#allocation6], 1
    %797 = vsyncpa %s796, 1
    %798 = vsyncpa [#allocation9], 1
    %s799 = scalar_lea.sflag [#allocation9], 1
    %800 = vsyncpa %s799, 1
    %801 = vsyncpa [#allocation4], 1
    %s802 = scalar_lea.sflag [#allocation4], 1
    %803 = vsyncpa %s802, 1
    %804 = vsyncpa [#allocation12], 1
    %s805 = scalar_lea.sflag [#allocation12], 1
    %806 = vsyncpa %s805, 1

</llo_original>
